<compile_context>
chip_gen: v7x
topology: tpu7x:2x2x1
jax: 0.10.0
libtpu: 0.0.40
codegen_flags: <defaults>
</compile_context>

<pallas_src>
import functools

import jax
import jax.numpy as jnp
from jax.experimental import pallas as pl
from jax.experimental.pallas import tpu as pltpu

_LANE = 128
_SUBLANE = 8
_MIB = 1024 * 1024


def _round_up(x, m):
    return (x + m - 1) // m * m


def _cdiv(a, b):
    return (a + b - 1) // b


def _vmem_capacity_bytes():
    try:
        return int(pltpu.get_tpu_info().vmem_capacity_bytes)
    except Exception:
        return 64 * _MIB  # conservative default (v7x per-TensorCore VMEM)


def _pick_tile(padded_dim, candidates, cap):
    """Largest candidate <= cap that exactly divides padded_dim.

    padded_dim is always a positive multiple of 128 and 128 is among the
    candidates, so this always succeeds and the pre-padded weight never needs
    re-padding at call time.
    """
    for c in candidates:
        if c <= cap and padded_dim % c == 0:
            return c
    return _LANE


# ---------------------------------------------------------------------------
# Kernels
# ---------------------------------------------------------------------------

def _linear_kernel_acc(x_ref, wt_ref, b_ref, o_ref, acc_ref):
    # Multi-K-step variant: K-resident f32 accumulator, bias added once.
    # x_ref: (TM, TK)  wt_ref: (TK, TN)  b_ref: (1, TN)
    # o_ref: (TM, TN)  acc_ref: (TM, TN) f32 scratch (resident across K)
    k = pl.program_id(2)

    @pl.when(k == 0)
    def _():
        acc_ref[...] = jnp.zeros_like(acc_ref)

    acc_ref[...] += jnp.dot(
        x_ref[...], wt_ref[...], preferred_element_type=jnp.float32)

    @pl.when(k == pl.num_programs(2) - 1)
    def _():
        o_ref[...] = (acc_ref[...] + b_ref[...]).astype(o_ref.dtype)


def _linear_kernel_single_k(x_ref, wt_ref, b_ref, o_ref):
    # Whole K in one block: no scratch accumulator, no predicated branches.
    o_ref[...] = (
        jnp.dot(x_ref[...], wt_ref[...], preferred_element_type=jnp.float32)
        + b_ref[...]
    ).astype(o_ref.dtype)


# ---------------------------------------------------------------------------
# Wrapper
# ---------------------------------------------------------------------------

@functools.partial(jax.jit, static_argnames=("out_features",))
def _linear_2d(x2d, w_t_pad, bias_pad, *, out_features):
    """x2d: (M, K); w_t_pad: (Kp, Np) pre-padded W^T; bias_pad: (1, Np)."""
    M, K = x2d.shape
    Kp, Np = w_t_pad.shape
    OUT = out_features

    vmem = _vmem_capacity_bytes()
    # 64 MiB per-core VMEM => v7x-like chip (2 TensorCores, smaller budget).
    small_vmem = vmem <= 64 * _MIB
    if small_vmem:
        tm_cap, tn_cap, tk_cap = 256, 512, 1024
    else:
        tm_cap, tn_cap, tk_cap = 512, 512, 2048
    vmem_limit = min((vmem * 3) // 4, 96 * _MIB)

    # TK / TN must divide the pre-padded weight dims exactly.
    TK = _pick_tile(Kp, (2048, 1024, 512, 256, 128), tk_cap)
    TN = _pick_tile(Np, (512, 256, 128), tn_cap)

    # TM: full MXU row passes for large M, sublane minimum for small M.
    if M >= _LANE:
        TM = min(tm_cap, _round_up(M, _LANE))
    else:
        TM = _round_up(M, _SUBLANE)

    # v7x megacore: keep at least 2 parallel output blocks so both
    # TensorCores get work (single-core v5e/v6e don't need this).
    if small_vmem and M > _LANE and TM >= M and (Np // TN) < 2:
        TM = max(_LANE, _round_up(_cdiv(M, 2), _LANE))

    Mp = _round_up(M, TM)

    # Only the activation may need padding at call time (weight/bias are
    # pre-padded at init). Padded K rows are zero on both operands => exact.
    if (Mp, Kp) != (M, K):
        x2d = jnp.pad(x2d, ((0, Mp - M), (0, Kp - K)))

    gm, gn, gk = Mp // TM, Np // TN, Kp // TK

    if gk == 1:
        out = pl.pallas_call(
            _linear_kernel_single_k,
            out_shape=jax.ShapeDtypeStruct((Mp, Np), x2d.dtype),
            grid_spec=pltpu.PrefetchScalarGridSpec(
                num_scalar_prefetch=0,
                grid=(gm, gn),
                in_specs=[
                    pl.BlockSpec((TM, TK), lambda i, j: (i, 0)),   # x
                    pl.BlockSpec((TK, TN), lambda i, j: (0, j)),   # W^T
                    pl.BlockSpec((1, TN), lambda i, j: (0, j)),    # bias
                ],
                out_specs=pl.BlockSpec((TM, TN), lambda i, j: (i, j)),
            ),
            compiler_params=pltpu.CompilerParams(
                dimension_semantics=("parallel", "parallel"),
                vmem_limit_bytes=vmem_limit,
            ),
        )(x2d, w_t_pad, bias_pad)
    else:
        out = pl.pallas_call(
            _linear_kernel_acc,
            out_shape=jax.ShapeDtypeStruct((Mp, Np), x2d.dtype),
            grid_spec=pltpu.PrefetchScalarGridSpec(
                num_scalar_prefetch=0,
                grid=(gm, gn, gk),
                in_specs=[
                    pl.BlockSpec((TM, TK), lambda i, j, k: (i, k)),   # x
                    pl.BlockSpec((TK, TN), lambda i, j, k: (k, j)),   # W^T
                    pl.BlockSpec((1, TN), lambda i, j, k: (0, j)),    # bias
                ],
                out_specs=pl.BlockSpec((TM, TN), lambda i, j, k: (i, j)),
                scratch_shapes=[pltpu.VMEM((TM, TN), jnp.float32)],
            ),
            compiler_params=pltpu.CompilerParams(
                dimension_semantics=("parallel", "parallel", "arbitrary"),
                vmem_limit_bytes=vmem_limit,
            ),
        )(x2d, w_t_pad, bias_pad)

    if (Mp, Np) != (M, OUT):
        out = out[:M, :OUT]
    return out


class LinearEx:
    """JAX/Pallas equivalent of the PyTorch LinearEx module (f32 forward)."""

    def __init__(self, in_size, out_size, key):
        kw, kb = jax.random.split(key)
        bound = 1.0 / (float(in_size) ** 0.5)
        self.in_size = in_size
        self.out_size = out_size
        # nn.Linear default init: U(-1/sqrt(in), 1/sqrt(in)) for weight & bias.
        # self.weight is kept only for the reference check / tiny-shape fallback.
        self.weight = jax.random.uniform(
            kw, (out_size, in_size), jnp.float32, -bound, bound)
        self.bias = jax.random.uniform(
            kb, (out_size,), jnp.float32, -bound, bound)

        # Pre-pad W^T and bias ONCE at init to lane-aligned shapes so the
        # per-call path never re-reads/re-writes the whole weight.
        k_pad = _round_up(in_size, _LANE)
        n_pad = _round_up(out_size, _LANE)
        self.weight_t_padded = (
            jnp.zeros((k_pad, n_pad), jnp.float32)
            .at[:in_size, :out_size].set(self.weight.T)
        )
        self.bias_padded = (
            jnp.zeros((1, n_pad), jnp.float32)
            .at[0, :out_size].set(self.bias)
        )

    def _use_pallas(self, m_rows):
        # Tiny layers: padding K/OUT to 128 inflates MXU work and the kernel
        # launch overhead dominates — XLA's fused dot is faster there.
        if self.in_size < _LANE or self.out_size < _LANE:
            return False
        return m_rows * self.in_size * self.out_size >= (1 << 22)

    def _forward_2d(self, x2d):
        if self._use_pallas(x2d.shape[0]):
            # TODO(synk): optional bf16 MXU path (cast x / W^T to bf16, keep
            # f32 accumulator) would be 2-4x faster on v6e/v7x but changes
            # numerics vs. the f32 PyTorch reference, so it is not enabled.
            return _linear_2d(x2d, self.weight_t_padded, self.bias_padded,
                              out_features=self.out_size)
        return x2d @ self.weight.T + self.bias

    def __call__(self, x):
        if x.ndim == 2:
            return self._forward_2d(x)
        elif x.ndim == 3:
            batch_size, seq_len, _ = x.shape
            y = self._forward_2d(x.reshape(batch_size * seq_len, -1))
            return y.reshape(batch_size, seq_len, -1)
        else:
            raise ValueError(
                f"Invalid input size, expected (N, C) or (N, L, C), but got {x.shape}")


if __name__ == "__main__":
    key = jax.random.PRNGKey(0)
    k1, k2, k3, k4, k5, k6, k7 = jax.random.split(key, 7)

    # 1) Tiny layer (32 -> 32): exercises the plain-JAX small-shape fallback.
    small = LinearEx(32, 32, k1)
    x2 = jax.random.normal(k2, (2, 32), jnp.float32)            # (N, C)
    x3 = jax.random.normal(k3, (2, 8, 32), jnp.float32)         # (N, L, C)
    y2 = small(x2)
    y3 = small(x3)
    jax.block_until_ready((y2, y3))

    # 2) Medium layer (256 -> 384): exercises the single-K-step Pallas kernel.
    med = LinearEx(256, 384, k4)
    xm = jax.random.normal(k5, (2, 128, 256), jnp.float32)      # M = 256
    ym = med(xm)
    jax.block_until_ready(ym)

    # 3) Deep-K layer (4096 -> 128): exercises the multi-K accumulator kernel.
    deep = LinearEx(4096, 128, k6)
    xd = jax.random.normal(k7, (2, 128, 4096), jnp.float32)     # M = 256
    yd = deep(xd)
    jax.block_until_ready(yd)

    # Sanity-check against plain-JAX references.
    ref2 = x2 @ small.weight.T + small.bias
    ref3 = x3 @ small.weight.T + small.bias
    refm = xm @ med.weight.T + med.bias
    refd = xd @ deep.weight.T + deep.bias
    assert y2.shape == (2, 32)
    assert y3.shape == (2, 8, 32)
    assert ym.shape == (2, 128, 384)
    assert yd.shape == (2, 128, 128)
    assert jnp.allclose(y2, ref2, atol=1e-5, rtol=1e-5)
    assert jnp.allclose(y3, ref3, atol=1e-5, rtol=1e-5)
    assert jnp.allclose(ym, refm, atol=1e-4, rtol=1e-4)
    assert jnp.allclose(yd, refd, atol=1e-3, rtol=1e-4)

    print("KERNEL_OK")
</pallas_src>

<mosaic_0001>
module attributes {stable_mosaic.version = 11 : i64} {
  func.func @_linear_kernel_single_k(%arg0: i32, %arg1: i32, %arg2: memref<256x256xf32, #tpu.memory_space<vmem>>, %arg3: memref<256x128xf32, #tpu.memory_space<vmem>>, %arg4: memref<1x128xf32, #tpu.memory_space<vmem>>, %arg5: memref<256x128xf32, #tpu.memory_space<vmem>>) attributes {dimension_semantics = [#tpu.dimension_semantics<parallel>, #tpu.dimension_semantics<parallel>], iteration_bounds = array<i64: 1, 3>, scalar_prefetch = 0 : i64, scratch_operands = 0 : i64, tpu.core_type = #tpu.core_type<tc>, window_params = [{transform_indices = @transform_0, window_bounds = array<i64: 256, 256>}, {transform_indices = @transform_1, window_bounds = array<i64: 256, 128>}, {transform_indices = @transform_2, window_bounds = array<i64: 1, 128>}, {transform_indices = @transform_3, window_bounds = array<i64: 256, 128>}]} {
    %c0 = arith.constant 0 : index
    %c0_0 = arith.constant 0 : index
    %0 = vector.load %arg2[%c0, %c0_0] : memref<256x256xf32, #tpu.memory_space<vmem>>, vector<256x256xf32>
    %c0_1 = arith.constant 0 : index
    %c0_2 = arith.constant 0 : index
    %1 = vector.load %arg3[%c0_1, %c0_2] : memref<256x128xf32, #tpu.memory_space<vmem>>, vector<256x128xf32>
    %cst = arith.constant dense<0.000000e+00> : vector<256x128xf32>
    %2 = tpu.matmul %0, %1, %cst {dimension_numbers = #tpu.dot_dimension_numbers<[1], [0], [0], [1], [0, 0, 1, 1], [], []>} : vector<256x256xf32>, vector<256x128xf32>, vector<256x128xf32> -> vector<256x128xf32>
    %c0_3 = arith.constant 0 : index
    %c0_4 = arith.constant 0 : index
    %3 = vector.load %arg4[%c0_3, %c0_4] : memref<1x128xf32, #tpu.memory_space<vmem>>, vector<1x128xf32>
    %4 = vector.broadcast %3 : vector<1x128xf32> to vector<256x128xf32>
    %5 = arith.addf %2, %4 : vector<256x128xf32>
    %c0_5 = arith.constant 0 : index
    %c0_6 = arith.constant 0 : index
    %6 = vector.load %arg5[%c0_5, %c0_6] : memref<256x128xf32, #tpu.memory_space<vmem>>, vector<256x128xf32>
    tpu.vector_store %arg5[%c0_5, %c0_6], %5 {strides = array<i32>} : memref<256x128xf32, #tpu.memory_space<vmem>>, vector<256x128xf32>,
    return
  }
  func.func @transform_0(%arg0: i32, %arg1: i32) -> (i32, i32) {
    %c0_i32 = arith.constant 0 : i32
    %c0_i32_0 = arith.constant 0 : i32
    return %arg0, %c0_i32 : i32, i32
  }
  func.func @transform_1(%arg0: i32, %arg1: i32) -> (i32, i32) {
    %c0_i32 = arith.constant 0 : i32
    %c0_i32_0 = arith.constant 0 : i32
    return %c0_i32, %arg1 : i32, i32
  }
  func.func @transform_2(%arg0: i32, %arg1: i32) -> (i32, i32) {
    %c0_i32 = arith.constant 0 : i32
    %c0_i32_0 = arith.constant 0 : i32
    return %c0_i32, %arg1 : i32, i32
  }
  func.func @transform_3(%arg0: i32, %arg1: i32) -> (i32, i32) {
    %c0_i32 = arith.constant 0 : i32
    return %arg0, %arg1 : i32, i32
  }
}

</mosaic_0001>

<llo_original>
// kernel: _linear_2d.1
$region0: #{_linear_2d.1}
  #allocation0 [shape = 'u32[]', space=smem, size = 0x4, offset = 0x4, fixed_abs, tag = 'smem constant byte address 0x4 - core index']
  #allocation1 [shape = 'u32[144,128]{1,0:T(1,128)}', space=vmem, size = 0x12000, scoped, tag = 'internal scratch']
  %s0 = inlined_call_operand.hbm [shape: f32[256,256], index: 0, kind: input, shape index: {}]
  %s1 = inlined_call_operand.hbm [shape: f32[256,384], index: 1, kind: input, shape index: {}]
  %s2 = inlined_call_operand.vmem [shape: f32[1,384], index: 2, kind: input, shape index: {}]
  %s3 = inlined_call_operand.hbm [shape: f32[256,384], index: 3, kind: output, shape index: {}]
  %s4 = sld [smem:[#allocation0]]
  $region53: #{_linear_2d.1} parent=0
    _
  %s6 = ssub.s32 1, %s4
  %s7 = scalar_select 0, %s6, %s4
  $region1: #{_linear_2d.1} parent=0
    #allocation2 [shape = 'u8[262144]{0}', space=vmem, size = 0x40000, scoped, tag = 'input window, operand 0, single buffered']
    #allocation3 [shape = 's32[2]{0}', space=sflag, size = 0x8, scoped, tag = 'scoped memory for _linear_2d.1']
    #allocation4 [shape = 's32[2]{0}', space=sflag, size = 0x8, scoped, tag = 'scoped memory for _linear_2d.1']
    #allocation5 [shape = 'u8[262144]{0}', space=vmem, size = 0x40000, scoped, tag = 'input window, operand 1']
    #allocation6 [shape = 's32[2]{0}', space=sflag, size = 0x8, scoped, tag = 'scoped memory for _linear_2d.1']
    #allocation7 [shape = 'u8[262144]{0}', space=vmem, size = 0x40000, scoped, tag = 'output window, operand 0']
    %8 = vsyncpa [#allocation3], 0
    %9 = vsyncpa [#allocation6], 0
    %s10 = scalar_lea.sflag [#allocation6], 1
    %11 = vsyncpa %s10, 0
    %12 = vsyncpa [#allocation4], 0
    %s13 = scalar_lea.sflag [#allocation4], 1
    %14 = vsyncpa %s13, 0
    loop: start=0, step=1, limit=5
    $region2: #{_linear_2d.1} parent=1 // loop_pre_header
      _
    $region3: #{_linear_2d.1} parent=1 // loop_header
      %s16 = sphi 0, %s20
      %p17 = scmp.ge.s32.totalorder %s16, 5
      %s23 = sphi 0, %s35
      %s24 = sphi 0, %s31
      %s25 = sphi 0, %s23
      %s26 = sphi 0, %s24
      %s27 = sphi 0, %s25
      %s28 = sphi 0, %s26
      %s38 = sphi 0, %s40
      %s41 = sphi 0, %s38
      %s42 = sphi 0, %s41
      %s58 = sphi 0, %s42
      %s64 = sphi 0, %s66
      %s67 = sphi 0, %s64
      %s68 = sphi 0, %s67
      %s84 = sphi 0, %s68
      %s90 = sphi 0, %s92
      %s93 = sphi 0, %s90
      %s94 = sphi 0, %s93
      %s110 = sphi 0, %s94
      %s118 = sphi 0, %s120
      %s121 = sphi 0, %s118
      %s122 = sphi 0, %s121
      %s138 = sphi 0, %s122
    $region4: #{_linear_2d.1} parent=1 // loop_header_branch
      %19 = sbr.rel (%p17) target = $region8
    $region5: #{_linear_2d.1} parent=1 // loop_body
      %s21 = ssub.s32 %s16, 1
      %s22 = ssub.s32 %s16, 2
      %s29 = sadd.s32 1, %s24
      %p30 = scmp.ge.s32.totalorder %s29, 3
      %s31 = scalar_select %p30, 0, %s29
      %s32 = sadd.s32 1, %s23
      %s33 = scalar_select %p30, %s32, %s23
      %p34 = scmp.ge.s32.totalorder %s33, 1
      %s35 = scalar_select %p34, 0, %s33
      %s36 = ssub.s32 %s23, %s35
      %p37 = scmp.eq.s32.totalorder %s36, 0
      %s39 = sadd.s32 %s38, 1
      %s40 = scalar_select %p37, %s38, %s39
      %p43 = pneg %p37
      %p44 = scmp.eq.s32.totalorder %s16, 2
      %p45 = por %p43, %p44
      %p46 = scmp.ne.s32.totalorder %s38, %s41
      %p47 = scmp.eq.s32.totalorder %s16, 0
      %p48 = por %p46, %p47
      %p49 = scmp.ne.s32.totalorder %s38, %s41
      %p50 = scmp.eq.s32.totalorder %s21, 2
      %p51 = por %p49, %p50
      %p52 = scmp.ne.s32.totalorder %s41, %s42
      %p53 = scmp.eq.s32.totalorder %s21, 0
      %p54 = por %p52, %p53
      %p55 = scmp.ne.s32.totalorder %s41, %s42
      %p56 = scmp.eq.s32.totalorder %s22, 2
      %p57 = por %p55, %p56
      %p59 = scmp.ne.s32.totalorder %s42, %s58
      %p60 = scmp.eq.s32.totalorder %s22, 0
      %p61 = por %p59, %p60
      %s62 = ssub.s32 %s24, %s31
      %p63 = scmp.eq.s32.totalorder %s62, 0
      %s65 = sadd.s32 %s64, 1
      %s66 = scalar_select %p63, %s64, %s65
      %p69 = pneg %p63
      %p70 = scmp.eq.s32.totalorder %s16, 2
      %p71 = por %p69, %p70
      %p72 = scmp.ne.s32.totalorder %s64, %s67
      %p73 = scmp.eq.s32.totalorder %s16, 0
      %p74 = por %p72, %p73
      %p75 = scmp.ne.s32.totalorder %s64, %s67
      %p76 = scmp.eq.s32.totalorder %s21, 2
      %p77 = por %p75, %p76
      %p78 = scmp.ne.s32.totalorder %s67, %s68
      %p79 = scmp.eq.s32.totalorder %s21, 0
      %p80 = por %p78, %p79
      %p81 = scmp.ne.s32.totalorder %s67, %s68
      %p82 = scmp.eq.s32.totalorder %s22, 2
      %p83 = por %p81, %p82
      %p85 = scmp.ne.s32.totalorder %s68, %s84
      %p86 = scmp.eq.s32.totalorder %s22, 0
      %p87 = por %p85, %p86
      %s88 = ssub.s32 %s24, %s31
      %p89 = scmp.eq.s32.totalorder %s88, 0
      %s91 = sadd.s32 %s90, 1
      %s92 = scalar_select %p89, %s90, %s91
      %p95 = pneg %p89
      %p96 = scmp.eq.s32.totalorder %s16, 2
      %p97 = por %p95, %p96
      %p98 = scmp.ne.s32.totalorder %s90, %s93
      %p99 = scmp.eq.s32.totalorder %s16, 0
      %p100 = por %p98, %p99
      %p101 = scmp.ne.s32.totalorder %s90, %s93
      %p102 = scmp.eq.s32.totalorder %s21, 2
      %p103 = por %p101, %p102
      %p104 = scmp.ne.s32.totalorder %s93, %s94
      %p105 = scmp.eq.s32.totalorder %s21, 0
      %p106 = por %p104, %p105
      %p107 = scmp.ne.s32.totalorder %s93, %s94
      %p108 = scmp.eq.s32.totalorder %s22, 2
      %p109 = por %p107, %p108
      %p111 = scmp.ne.s32.totalorder %s94, %s110
      %p112 = scmp.eq.s32.totalorder %s22, 0
      %p113 = por %p111, %p112
      %s114 = ssub.s32 %s23, %s35
      %s115 = ssub.s32 %s24, %s31
      %s116 = sor.u32 %s114, %s115
      %p117 = scmp.eq.s32.totalorder %s116, 0
      %s119 = sadd.s32 %s118, 1
      %s120 = scalar_select %p117, %s118, %s119
      %p123 = pneg %p117
      %p124 = scmp.eq.s32.totalorder %s16, 2
      %p125 = por %p123, %p124
      %p126 = scmp.ne.s32.totalorder %s118, %s121
      %p127 = scmp.eq.s32.totalorder %s16, 0
      %p128 = por %p126, %p127
      %p129 = scmp.ne.s32.totalorder %s118, %s121
      %p130 = scmp.eq.s32.totalorder %s21, 2
      %p131 = por %p129, %p130
      %p132 = scmp.ne.s32.totalorder %s121, %s122
      %p133 = scmp.eq.s32.totalorder %s21, 0
      %p134 = por %p132, %p133
      %p135 = scmp.ne.s32.totalorder %s121, %s122
      %p136 = scmp.eq.s32.totalorder %s22, 2
      %p137 = por %p135, %p136
      %p139 = scmp.ne.s32.totalorder %s122, %s138
      %p140 = scmp.eq.s32.totalorder %s22, 0
      %p141 = por %p139, %p140
      %p142 = scmp.le.s32.totalorder 1, %s16
      %p143 = scmp.lt.s32.totalorder %s16, 4
      %p144 = pnand %p142, %p143
      %p145 = pneg %p144
      // Predicated region
      $region9: #{_linear_2d.1} parent=5 // pred_check
        _
      $region10: #{_linear_2d.1} parent=5 // pred_check_branch
        %147 = sbr.rel (%p144) target = $region12
      $region11: #{_linear_2d.1} parent=5 // pred_region
        %s148 = ssub.s32 %s16, 1
        // Predicated region
        $region13: #{_linear_2d.1} parent=11 // pred_check
          %p149 = pneg %p54
        $region14: #{_linear_2d.1} parent=11 // pred_check_branch
          %151 = sbr.rel (%p149) target = $region16
        $region15: #{_linear_2d.1} parent=11 // pred_region
          %s152 = smul.u32 32, %s25
          %s154 = ssub.s32 8192, 8192
          %155 = vsyncadd [#allocation3], %s154
          %s156 = smul.addr %s152, 2
          %s157 = smul.addr %s156, 128
          %s158 = scalar_lea.hbm %s0, %s157
          %s159 = sshll.u32 [#allocation2], 4
          %s160 = int_to_ptr.vmem [resolvable:$true] %s159
          %165 = dma.hbm_to_vmem [thread:$0]  %s158, 8192, %s160, [#allocation3], 256, 256, 16
        $region16: #{_linear_2d.1} parent=11 // pred_fallthru
          _
      $region12: #{_linear_2d.1} parent=5 // pred_fallthru
        _
      %p166 = scmp.lt.s32.totalorder %s16, 3
      // Predicated region
      $region17: #{_linear_2d.1} parent=5 // pred_check
        %p167 = pneg %p166
      $region18: #{_linear_2d.1} parent=5 // pred_check_branch
        %169 = sbr.rel (%p167) target = $region20
      $region19: #{_linear_2d.1} parent=5 // pred_region
        // Predicated region
        $region21: #{_linear_2d.1} parent=19 // pred_check
          %p170 = pneg %p74
        $region22: #{_linear_2d.1} parent=19 // pred_check_branch
          %172 = sbr.rel (%p170) target = $region24
        $region23: #{_linear_2d.1} parent=19 // pred_region
          %s173 = sand.u32 %s64, 1
          %s174 = scalar_lea.sflag [#allocation6], %s173
          %s175 = sand.u32 %s64, 1
          %s176 = smul.addr %s175, 256
          %s177 = scalar_lea.vmem [#allocation5], %s176
          %s179 = ssub.s32 4096, 4096
          %180 = vsyncadd %s174, %s179
          %s181 = smul.addr %s24, 128
          %s182 = scalar_lea.hbm %s1, %s181
          %s183 = sshll.u32 %s177, 4
          %s184 = int_to_ptr.vmem [resolvable:$true] %s183
          %189 = dma.hbm_to_vmem [thread:$0]  %s182, 4096, %s184, %s174, 384, 128, 8
        $region24: #{_linear_2d.1} parent=19 // pred_fallthru
          _
        // Predicated region
        $region25: #{_linear_2d.1} parent=19 // pred_check
          %p190 = pneg %p100
        $region26: #{_linear_2d.1} parent=19 // pred_check_branch
          %192 = sbr.rel (%p190) target = $region28
        $region27: #{_linear_2d.1} parent=19 // pred_region
          %p193 = scmp.lt.s32.totalorder %s24, 2
          %s194 = scalar_select %p193, %s24, 2
          %s195 = scalar_lea.vmem %s2, %s194
        $region28: #{_linear_2d.1} parent=19 // pred_fallthru
          _
      $region20: #{_linear_2d.1} parent=5 // pred_fallthru
        _
      %p196 = scmp.le.s32.totalorder 1, %s16
      %p197 = scmp.lt.s32.totalorder %s16, 4
      %p198 = pnand %p196, %p197
      %p199 = pneg %p198
      // Predicated region
      $region29: #{_linear_2d.1} parent=5 // pred_check
        _
      $region30: #{_linear_2d.1} parent=5 // pred_check_branch
        %201 = sbr.rel (%p198) target = $region32
      $region31: #{_linear_2d.1} parent=5 // pred_region
        %s202 = ssub.s32 %s16, 1
        // Predicated region
        $region33: #{_linear_2d.1} parent=31 // pred_check
          %p203 = pneg %p54
        $region34: #{_linear_2d.1} parent=31 // pred_check_branch
          %205 = sbr.rel (%p203) target = $region36
        $region35: #{_linear_2d.1} parent=31 // pred_region
          %206 = dma.done [#allocation3], 8192
        $region36: #{_linear_2d.1} parent=31 // pred_fallthru
          _
        %s207 = sand.u32 %s67, 1
        %s208 = scalar_lea.sflag [#allocation6], %s207
        %s209 = sand.u32 %s67, 1
        %s210 = smul.addr %s209, 256
        %s211 = scalar_lea.vmem [#allocation5], %s210
        // Predicated region
        $region37: #{_linear_2d.1} parent=31 // pred_check
          %p212 = pneg %p80
        $region38: #{_linear_2d.1} parent=31 // pred_check_branch
          %214 = sbr.rel (%p212) target = $region40
        $region39: #{_linear_2d.1} parent=31 // pred_region
          %215 = dma.done %s208, 4096
        $region40: #{_linear_2d.1} parent=31 // pred_fallthru
          _
        %p216 = pneg %p54
        %p217 = pneg %p51
        %s218 = sand.u32 %s67, 1
        %s219 = scalar_lea.sflag [#allocation6], %s218
        %s220 = sand.u32 %s67, 1
        %s221 = smul.addr %s220, 256
        %s222 = scalar_lea.vmem [#allocation5], %s221
        %p223 = pneg %p80
        %p224 = pneg %p77
        %p225 = scmp.lt.s32.totalorder %s26, 2
        %s226 = scalar_select %p225, %s26, 2
        %s227 = scalar_lea.vmem %s2, %s226
        %p228 = pneg %p106
        %p229 = pneg %p103
        %p230 = pneg %p134
        %p231 = pneg %p131
        %s232 = sand.u32 %s121, 1
        %s233 = scalar_lea.sflag [#allocation4], %s232
        %s234 = sand.u32 %s121, 1
        %s235 = smul.addr %s234, 256
        %s236 = scalar_lea.vmem [#allocation7], %s235
        %s237 = smul.u32 32, %s25
        %p238 = scmp.lt.s32.totalorder %s26, 2
        %s239 = scalar_select %p238, %s26, 2
        %s240 = scalar_lea.vmem %s2, %s239
        %s241 = smul.u32 32, %s25
        %v242 = vld [vmem:[#allocation2] sm:$0xff]
        %v243 = vld [vmem:[#allocation2 + $0x8] sm:$0xff]
        %v244 = vld [vmem:[#allocation2 + $0x10] sm:$0xff]
        %v245 = vld [vmem:[#allocation2 + $0x18] sm:$0xff]
        %v246 = vld [vmem:[#allocation2 + $0x20] sm:$0xff]
        %v247 = vld [vmem:[#allocation2 + $0x28] sm:$0xff]
        %v248 = vld [vmem:[#allocation2 + $0x30] sm:$0xff]
        %v249 = vld [vmem:[#allocation2 + $0x38] sm:$0xff]
        %v250 = vld [vmem:[#allocation2 + $0x40] sm:$0xff]
        %v251 = vld [vmem:[#allocation2 + $0x48] sm:$0xff]
        %v252 = vld [vmem:[#allocation2 + $0x50] sm:$0xff]
        %v253 = vld [vmem:[#allocation2 + $0x58] sm:$0xff]
        %v254 = vld [vmem:[#allocation2 + $0x60] sm:$0xff]
        %v255 = vld [vmem:[#allocation2 + $0x68] sm:$0xff]
        %v256 = vld [vmem:[#allocation2 + $0x70] sm:$0xff]
        %v257 = vld [vmem:[#allocation2 + $0x78] sm:$0xff]
        %v258 = vld [vmem:[#allocation2 + $0x80] sm:$0xff]
        %v259 = vld [vmem:[#allocation2 + $0x88] sm:$0xff]
        %v260 = vld [vmem:[#allocation2 + $0x90] sm:$0xff]
        %v261 = vld [vmem:[#allocation2 + $0x98] sm:$0xff]
        %v262 = vld [vmem:[#allocation2 + $0xa0] sm:$0xff]
        %v263 = vld [vmem:[#allocation2 + $0xa8] sm:$0xff]
        %v264 = vld [vmem:[#allocation2 + $0xb0] sm:$0xff]
        %v265 = vld [vmem:[#allocation2 + $0xb8] sm:$0xff]
        %v266 = vld [vmem:[#allocation2 + $0xc0] sm:$0xff]
        %v267 = vld [vmem:[#allocation2 + $0xc8] sm:$0xff]
        %v268 = vld [vmem:[#allocation2 + $0xd0] sm:$0xff]
        %v269 = vld [vmem:[#allocation2 + $0xd8] sm:$0xff]
        %v270 = vld [vmem:[#allocation2 + $0xe0] sm:$0xff]
        %v271 = vld [vmem:[#allocation2 + $0xe8] sm:$0xff]
        %v272 = vld [vmem:[#allocation2 + $0xf0] sm:$0xff]
        %v273 = vld [vmem:[#allocation2 + $0xf8] sm:$0xff]
        %v274 = vld [vmem:[#allocation2 + $0x100] sm:$0xff]
        %v275 = vld [vmem:[#allocation2 + $0x108] sm:$0xff]
        %v276 = vld [vmem:[#allocation2 + $0x110] sm:$0xff]
        %v277 = vld [vmem:[#allocation2 + $0x118] sm:$0xff]
        %v278 = vld [vmem:[#allocation2 + $0x120] sm:$0xff]
        %v279 = vld [vmem:[#allocation2 + $0x128] sm:$0xff]
        %v280 = vld [vmem:[#allocation2 + $0x130] sm:$0xff]
        %v281 = vld [vmem:[#allocation2 + $0x138] sm:$0xff]
        %v282 = vld [vmem:[#allocation2 + $0x140] sm:$0xff]
        %v283 = vld [vmem:[#allocation2 + $0x148] sm:$0xff]
        %v284 = vld [vmem:[#allocation2 + $0x150] sm:$0xff]
        %v285 = vld [vmem:[#allocation2 + $0x158] sm:$0xff]
        %v286 = vld [vmem:[#allocation2 + $0x160] sm:$0xff]
        %v287 = vld [vmem:[#allocation2 + $0x168] sm:$0xff]
        %v288 = vld [vmem:[#allocation2 + $0x170] sm:$0xff]
        %v289 = vld [vmem:[#allocation2 + $0x178] sm:$0xff]
        %v290 = vld [vmem:[#allocation2 + $0x180] sm:$0xff]
        %v291 = vld [vmem:[#allocation2 + $0x188] sm:$0xff]
        %v292 = vld [vmem:[#allocation2 + $0x190] sm:$0xff]
        %v293 = vld [vmem:[#allocation2 + $0x198] sm:$0xff]
        %v294 = vld [vmem:[#allocation2 + $0x1a0] sm:$0xff]
        %v295 = vld [vmem:[#allocation2 + $0x1a8] sm:$0xff]
        %v296 = vld [vmem:[#allocation2 + $0x1b0] sm:$0xff]
        %v297 = vld [vmem:[#allocation2 + $0x1b8] sm:$0xff]
        %v298 = vld [vmem:[#allocation2 + $0x1c0] sm:$0xff]
        %v299 = vld [vmem:[#allocation2 + $0x1c8] sm:$0xff]
        %v300 = vld [vmem:[#allocation2 + $0x1d0] sm:$0xff]
        %v301 = vld [vmem:[#allocation2 + $0x1d8] sm:$0xff]
        %v302 = vld [vmem:[#allocation2 + $0x1e0] sm:$0xff]
        %v303 = vld [vmem:[#allocation2 + $0x1e8] sm:$0xff]
        %v304 = vld [vmem:[#allocation2 + $0x1f0] sm:$0xff]
        %v305 = vld [vmem:[#allocation2 + $0x1f8] sm:$0xff]
        %v306 = vld [vmem:[%s211] sm:$0xff]
        %v307 = vld [vmem:[%s211 + $0x8] sm:$0xff]
        %v308 = vld [vmem:[%s211 + $0x10] sm:$0xff]
        %v309 = vld [vmem:[%s211 + $0x18] sm:$0xff]
        %v310 = vld [vmem:[%s211 + $0x20] sm:$0xff]
        %v311 = vld [vmem:[%s211 + $0x28] sm:$0xff]
        %v312 = vld [vmem:[%s211 + $0x30] sm:$0xff]
        %v313 = vld [vmem:[%s211 + $0x38] sm:$0xff]
        %v314 = vld [vmem:[%s211 + $0x40] sm:$0xff]
        %v315 = vld [vmem:[%s211 + $0x48] sm:$0xff]
        %v316 = vld [vmem:[%s211 + $0x50] sm:$0xff]
        %v317 = vld [vmem:[%s211 + $0x58] sm:$0xff]
        %v318 = vld [vmem:[%s211 + $0x60] sm:$0xff]
        %v319 = vld [vmem:[%s211 + $0x68] sm:$0xff]
        %v320 = vld [vmem:[%s211 + $0x70] sm:$0xff]
        %v321 = vld [vmem:[%s211 + $0x78] sm:$0xff]
        %v322 = vld [vmem:[%s211 + $0x80] sm:$0xff]
        %v323 = vld [vmem:[%s211 + $0x88] sm:$0xff]
        %v324 = vld [vmem:[%s211 + $0x90] sm:$0xff]
        %v325 = vld [vmem:[%s211 + $0x98] sm:$0xff]
        %v326 = vld [vmem:[%s211 + $0xa0] sm:$0xff]
        %v327 = vld [vmem:[%s211 + $0xa8] sm:$0xff]
        %v328 = vld [vmem:[%s211 + $0xb0] sm:$0xff]
        %v329 = vld [vmem:[%s211 + $0xb8] sm:$0xff]
        %v330 = vld [vmem:[%s211 + $0xc0] sm:$0xff]
        %v331 = vld [vmem:[%s211 + $0xc8] sm:$0xff]
        %v332 = vld [vmem:[%s211 + $0xd0] sm:$0xff]
        %v333 = vld [vmem:[%s211 + $0xd8] sm:$0xff]
        %v334 = vld [vmem:[%s211 + $0xe0] sm:$0xff]
        %v335 = vld [vmem:[%s211 + $0xe8] sm:$0xff]
        %v336 = vld [vmem:[%s211 + $0xf0] sm:$0xff]
        %v337 = vld [vmem:[%s211 + $0xf8] sm:$0xff]
        %v338 = vld [vmem:[%s240] sm:$0x1]
        %v340 = vlaneseq
        %v341 = vshrl.u32 %v340, 7
        %v342 = vsub.s32 0, %v341
        %v343 = vrot.slane %v338, %v342
        %345 = vmatprep.subr.mxu0 0.0
        %346 = vmatpush1.msra.mxu0 %v306
        %347 = vmatprep.subr.mxu0 0.0
        %348 = vmatpush1.msra.mxu0 %v307
        %349 = vmatprep.subr.mxu0 0.0
        %350 = vmatpush1.msra.mxu0 %v308
        %351 = vmatprep.subr.mxu0 0.0
        %352 = vmatpush1.msra.mxu0 %v309
        %353 = vmatprep.subr.mxu0 0.0
        %354 = vmatpush1.msra.mxu0 %v310
        %355 = vmatprep.subr.mxu0 0.0
        %356 = vmatpush1.msra.mxu0 %v311
        %357 = vmatprep.subr.mxu0 0.0
        %358 = vmatpush1.msra.mxu0 %v312
        %359 = vmatprep.subr.mxu0 0.0
        %360 = vmatpush1.msra.mxu0 %v313
        %361 = vmatprep.subr.mxu0 0.0
        %362 = vmatpush1.msra.mxu0 %v314
        %363 = vmatprep.subr.mxu0 0.0
        %364 = vmatpush1.msra.mxu0 %v315
        %365 = vmatprep.subr.mxu0 0.0
        %366 = vmatpush1.msra.mxu0 %v316
        %367 = vmatprep.subr.mxu0 0.0
        %368 = vmatpush1.msra.mxu0 %v317
        %369 = vmatprep.subr.mxu0 0.0
        %370 = vmatpush1.msra.mxu0 %v318
        %371 = vmatprep.subr.mxu0 0.0
        %372 = vmatpush1.msra.mxu0 %v319
        %373 = vmatprep.subr.mxu0 0.0
        %374 = vmatpush1.msra.mxu0 %v320
        %375 = vmatprep.subr.mxu0 0.0
        %376 = vmatpush1.msra.mxu0 %v321
        %377 = vmatprep.subr.mxu0 0.0
        %378 = vmatpush1.msra.mxu0 %v322
        %379 = vmatprep.subr.mxu0 0.0
        %380 = vmatpush1.msra.mxu0 %v323
        %381 = vmatprep.subr.mxu0 0.0
        %382 = vmatpush1.msra.mxu0 %v324
        %383 = vmatprep.subr.mxu0 0.0
        %384 = vmatpush1.msra.mxu0 %v325
        %385 = vmatprep.subr.mxu0 0.0
        %386 = vmatpush1.msra.mxu0 %v326
        %387 = vmatprep.subr.mxu0 0.0
        %388 = vmatpush1.msra.mxu0 %v327
        %389 = vmatprep.subr.mxu0 0.0
        %390 = vmatpush1.msra.mxu0 %v328
        %391 = vmatprep.subr.mxu0 0.0
        %392 = vmatpush1.msra.mxu0 %v329
        %393 = vmatprep.subr.mxu0 0.0
        %394 = vmatpush1.msra.mxu0 %v330
        %395 = vmatprep.subr.mxu0 0.0
        %396 = vmatpush1.msra.mxu0 %v331
        %397 = vmatprep.subr.mxu0 0.0
        %398 = vmatpush1.msra.mxu0 %v332
        %399 = vmatprep.subr.mxu0 0.0
        %400 = vmatpush1.msra.mxu0 %v333
        %401 = vmatprep.subr.mxu0 0.0
        %402 = vmatpush1.msra.mxu0 %v334
        %403 = vmatprep.subr.mxu0 0.0
        %404 = vmatpush1.msra.mxu0 %v335
        %405 = vmatprep.subr.mxu0 0.0
        %406 = vmatpush1.msra.mxu0 %v336
        %407 = vmatprep.subr.mxu0 0.0
        %408 = vmatpush1.msra.mxu0 %v337
        %409 = vmatprep.mubr.f32.mxu0 %v243
        %410 = vmatmul.mubr.f32.gmra.mrb[0].mxu0 %v242
        %v411 = vpop.f32.mrb[0].mxu0
        %v412 = vadd.f32 %v343, %v411
        %v413 = vpop.f32.mrb[0].mxu0
        %414 = vmatprep.mubr.f32.mxu0 %v245
        %415 = vmatmul.mubr.f32.gmra.mrb[0].mxu0 %v244
        %v416 = vpop.f32.mrb[0].mxu0
        %v417 = vadd.f32 %v343, %v416
        %v418 = vpop.f32.mrb[0].mxu0
        %419 = vmatprep.mubr.f32.mxu0 %v247
        %420 = vmatmul.mubr.f32.gmra.mrb[0].mxu0 %v246
        %v421 = vpop.f32.mrb[0].mxu0
        %v422 = vadd.f32 %v343, %v421
        %v423 = vpop.f32.mrb[0].mxu0
        %424 = vmatprep.mubr.f32.mxu0 %v249
        %425 = vmatmul.mubr.f32.gmra.mrb[0].mxu0 %v248
        %v426 = vpop.f32.mrb[0].mxu0
        %v427 = vadd.f32 %v343, %v426
        %v428 = vpop.f32.mrb[0].mxu0
        %429 = vmatprep.mubr.f32.mxu0 %v251
        %430 = vmatmul.mubr.f32.gmra.mrb[0].mxu0 %v250
        %v431 = vpop.f32.mrb[0].mxu0
        %v432 = vadd.f32 %v343, %v431
        %v433 = vpop.f32.mrb[0].mxu0
        %434 = vmatprep.mubr.f32.mxu0 %v253
        %435 = vmatmul.mubr.f32.gmra.mrb[0].mxu0 %v252
        %v436 = vpop.f32.mrb[0].mxu0
        %v437 = vadd.f32 %v343, %v436
        %v438 = vpop.f32.mrb[0].mxu0
        %439 = vmatprep.mubr.f32.mxu0 %v255
        %440 = vmatmul.mubr.f32.gmra.mrb[0].mxu0 %v254
        %v441 = vpop.f32.mrb[0].mxu0
        %v442 = vadd.f32 %v343, %v441
        %v443 = vpop.f32.mrb[0].mxu0
        %444 = vmatprep.mubr.f32.mxu0 %v257
        %445 = vmatmul.mubr.f32.gmra.mrb[0].mxu0 %v256
        %v446 = vpop.f32.mrb[0].mxu0
        %v447 = vadd.f32 %v343, %v446
        %v448 = vpop.f32.mrb[0].mxu0
        %449 = vmatprep.mubr.f32.mxu0 %v259
        %450 = vmatmul.mubr.f32.gmra.mrb[0].mxu0 %v258
        %v451 = vpop.f32.mrb[0].mxu0
        %v452 = vadd.f32 %v343, %v451
        %v453 = vpop.f32.mrb[0].mxu0
        %454 = vmatprep.mubr.f32.mxu0 %v261
        %455 = vmatmul.mubr.f32.gmra.mrb[0].mxu0 %v260
        %v456 = vpop.f32.mrb[0].mxu0
        %v457 = vadd.f32 %v343, %v456
        %v458 = vpop.f32.mrb[0].mxu0
        %459 = vmatprep.mubr.f32.mxu0 %v263
        %460 = vmatmul.mubr.f32.gmra.mrb[0].mxu0 %v262
        %v461 = vpop.f32.mrb[0].mxu0
        %v462 = vadd.f32 %v343, %v461
        %v463 = vpop.f32.mrb[0].mxu0
        %464 = vmatprep.mubr.f32.mxu0 %v265
        %465 = vmatmul.mubr.f32.gmra.mrb[0].mxu0 %v264
        %v466 = vpop.f32.mrb[0].mxu0
        %v467 = vadd.f32 %v343, %v466
        %v468 = vpop.f32.mrb[0].mxu0
        %469 = vmatprep.mubr.f32.mxu0 %v267
        %470 = vmatmul.mubr.f32.gmra.mrb[0].mxu0 %v266
        %v471 = vpop.f32.mrb[0].mxu0
        %v472 = vadd.f32 %v343, %v471
        %v473 = vpop.f32.mrb[0].mxu0
        %474 = vmatprep.mubr.f32.mxu0 %v269
        %475 = vmatmul.mubr.f32.gmra.mrb[0].mxu0 %v268
        %v476 = vpop.f32.mrb[0].mxu0
        %v477 = vadd.f32 %v343, %v476
        %v478 = vpop.f32.mrb[0].mxu0
        %479 = vmatprep.mubr.f32.mxu0 %v271
        %480 = vmatmul.mubr.f32.gmra.mrb[0].mxu0 %v270
        %v481 = vpop.f32.mrb[0].mxu0
        %v482 = vadd.f32 %v343, %v481
        %v483 = vpop.f32.mrb[0].mxu0
        %484 = vmatprep.mubr.f32.mxu0 %v273
        %485 = vmatmul.mubr.f32.gmra.mrb[0].mxu0 %v272
        %v486 = vpop.f32.mrb[0].mxu0
        %v487 = vadd.f32 %v343, %v486
        %v488 = vpop.f32.mrb[0].mxu0
        %489 = vmatprep.mubr.f32.mxu0 %v275
        %490 = vmatmul.mubr.f32.gmra.mrb[0].mxu0 %v274
        %v491 = vpop.f32.mrb[0].mxu0
        %v492 = vadd.f32 %v343, %v491
        %v493 = vpop.f32.mrb[0].mxu0
        %494 = vmatprep.mubr.f32.mxu0 %v277
        %495 = vmatmul.mubr.f32.gmra.mrb[0].mxu0 %v276
        %v496 = vpop.f32.mrb[0].mxu0
        %v497 = vadd.f32 %v343, %v496
        %v498 = vpop.f32.mrb[0].mxu0
        %499 = vmatprep.mubr.f32.mxu0 %v279
        %500 = vmatmul.mubr.f32.gmra.mrb[0].mxu0 %v278
        %v501 = vpop.f32.mrb[0].mxu0
        %v502 = vadd.f32 %v343, %v501
        %v503 = vpop.f32.mrb[0].mxu0
        %504 = vmatprep.mubr.f32.mxu0 %v281
        %505 = vmatmul.mubr.f32.gmra.mrb[0].mxu0 %v280
        %v506 = vpop.f32.mrb[0].mxu0
        %v507 = vadd.f32 %v343, %v506
        %v508 = vpop.f32.mrb[0].mxu0
        %509 = vmatprep.mubr.f32.mxu0 %v283
        %510 = vmatmul.mubr.f32.gmra.mrb[0].mxu0 %v282
        %v511 = vpop.f32.mrb[0].mxu0
        %v512 = vadd.f32 %v343, %v511
        %v513 = vpop.f32.mrb[0].mxu0
        %514 = vmatprep.mubr.f32.mxu0 %v285
        %515 = vmatmul.mubr.f32.gmra.mrb[0].mxu0 %v284
        %v516 = vpop.f32.mrb[0].mxu0
        %v517 = vadd.f32 %v343, %v516
        %v518 = vpop.f32.mrb[0].mxu0
        %519 = vmatprep.mubr.f32.mxu0 %v287
        %520 = vmatmul.mubr.f32.gmra.mrb[0].mxu0 %v286
        %v521 = vpop.f32.mrb[0].mxu0
        %v522 = vadd.f32 %v343, %v521
        %v523 = vpop.f32.mrb[0].mxu0
        %524 = vmatprep.mubr.f32.mxu0 %v289
        %525 = vmatmul.mubr.f32.gmra.mrb[0].mxu0 %v288
        %v526 = vpop.f32.mrb[0].mxu0
        %v527 = vadd.f32 %v343, %v526
        %v528 = vpop.f32.mrb[0].mxu0
        %529 = vmatprep.mubr.f32.mxu0 %v291
        %530 = vmatmul.mubr.f32.gmra.mrb[0].mxu0 %v290
        %v531 = vpop.f32.mrb[0].mxu0
        %v532 = vadd.f32 %v343, %v531
        %v533 = vpop.f32.mrb[0].mxu0
        %534 = vmatprep.mubr.f32.mxu0 %v293
        %535 = vmatmul.mubr.f32.gmra.mrb[0].mxu0 %v292
        %v536 = vpop.f32.mrb[0].mxu0
        %v537 = vadd.f32 %v343, %v536
        %v538 = vpop.f32.mrb[0].mxu0
        %539 = vmatprep.mubr.f32.mxu0 %v295
        %540 = vmatmul.mubr.f32.gmra.mrb[0].mxu0 %v294
        %v541 = vpop.f32.mrb[0].mxu0
        %v542 = vadd.f32 %v343, %v541
        %v543 = vpop.f32.mrb[0].mxu0
        %544 = vmatprep.mubr.f32.mxu0 %v297
        %545 = vmatmul.mubr.f32.gmra.mrb[0].mxu0 %v296
        %v546 = vpop.f32.mrb[0].mxu0
        %v547 = vadd.f32 %v343, %v546
        %v548 = vpop.f32.mrb[0].mxu0
        %549 = vmatprep.mubr.f32.mxu0 %v299
        %550 = vmatmul.mubr.f32.gmra.mrb[0].mxu0 %v298
        %v551 = vpop.f32.mrb[0].mxu0
        %v552 = vadd.f32 %v343, %v551
        %v553 = vpop.f32.mrb[0].mxu0
        %554 = vmatprep.mubr.f32.mxu0 %v301
        %555 = vmatmul.mubr.f32.gmra.mrb[0].mxu0 %v300
        %v556 = vpop.f32.mrb[0].mxu0
        %v557 = vadd.f32 %v343, %v556
        %v558 = vpop.f32.mrb[0].mxu0
        %559 = vmatprep.mubr.f32.mxu0 %v303
        %560 = vmatmul.mubr.f32.gmra.mrb[0].mxu0 %v302
        %v561 = vpop.f32.mrb[0].mxu0
        %v562 = vadd.f32 %v343, %v561
        %v563 = vpop.f32.mrb[0].mxu0
        %564 = vmatprep.mubr.f32.mxu0 %v305
        %565 = vmatmul.mubr.f32.gmra.mrb[0].mxu0 %v304
        %v566 = vpop.f32.mrb[0].mxu0
        %v567 = vadd.f32 %v343, %v566
        %v568 = vpop.f32.mrb[0].mxu0
        %569 = vdwg.mxu0
        %570 = vst [vmem:[%s236] sm:$0xff] %v412
        %571 = vst [vmem:[%s236 + $0x8] sm:$0xff] %v417
        %572 = vst [vmem:[%s236 + $0x10] sm:$0xff] %v422
        %573 = vst [vmem:[%s236 + $0x18] sm:$0xff] %v427
        %574 = vst [vmem:[%s236 + $0x20] sm:$0xff] %v432
        %575 = vst [vmem:[%s236 + $0x28] sm:$0xff] %v437
        %576 = vst [vmem:[%s236 + $0x30] sm:$0xff] %v442
        %577 = vst [vmem:[%s236 + $0x38] sm:$0xff] %v447
        %578 = vst [vmem:[%s236 + $0x40] sm:$0xff] %v452
        %579 = vst [vmem:[%s236 + $0x48] sm:$0xff] %v457
        %580 = vst [vmem:[%s236 + $0x50] sm:$0xff] %v462
        %581 = vst [vmem:[%s236 + $0x58] sm:$0xff] %v467
        %582 = vst [vmem:[%s236 + $0x60] sm:$0xff] %v472
        %583 = vst [vmem:[%s236 + $0x68] sm:$0xff] %v477
        %584 = vst [vmem:[%s236 + $0x70] sm:$0xff] %v482
        %585 = vst [vmem:[%s236 + $0x78] sm:$0xff] %v487
        %586 = vst [vmem:[%s236 + $0x80] sm:$0xff] %v492
        %587 = vst [vmem:[%s236 + $0x88] sm:$0xff] %v497
        %588 = vst [vmem:[%s236 + $0x90] sm:$0xff] %v502
        %589 = vst [vmem:[%s236 + $0x98] sm:$0xff] %v507
        %590 = vst [vmem:[%s236 + $0xa0] sm:$0xff] %v512
        %591 = vst [vmem:[%s236 + $0xa8] sm:$0xff] %v517
        %592 = vst [vmem:[%s236 + $0xb0] sm:$0xff] %v522
        %593 = vst [vmem:[%s236 + $0xb8] sm:$0xff] %v527
        %594 = vst [vmem:[%s236 + $0xc0] sm:$0xff] %v532
        %595 = vst [vmem:[%s236 + $0xc8] sm:$0xff] %v537
        %596 = vst [vmem:[%s236 + $0xd0] sm:$0xff] %v542
        %597 = vst [vmem:[%s236 + $0xd8] sm:$0xff] %v547
        %598 = vst [vmem:[%s236 + $0xe0] sm:$0xff] %v552
        %599 = vst [vmem:[%s236 + $0xe8] sm:$0xff] %v557
        %600 = vst [vmem:[%s236 + $0xf0] sm:$0xff] %v562
        %601 = vst [vmem:[%s236 + $0xf8] sm:$0xff] %v567
        %s602 = sand.u32 %s121, 1
        %s603 = scalar_lea.sflag [#allocation4], %s602
        %s604 = sand.u32 %s121, 1
        %s605 = smul.addr %s604, 256
        %s606 = scalar_lea.vmem [#allocation7], %s605
        // Predicated region
        $region41: #{_linear_2d.1} parent=31 // pred_check
          %p607 = pneg %p131
        $region42: #{_linear_2d.1} parent=31 // pred_check_branch
          %609 = sbr.rel (%p607) target = $region44
        $region43: #{_linear_2d.1} parent=31 // pred_region
          %s610 = smul.u32 32, %s25
          %s612 = ssub.s32 4096, 4096
          %613 = vsyncadd %s603, %s612
          %s614 = smul.addr %s610, 3
          %s615 = sadd.s32 %s26, %s614
          %s616 = smul.addr %s615, 128
          %s617 = scalar_lea.hbm %s3, %s616
          %s618 = sshll.u32 %s606, 4
          %s619 = int_to_ptr.vmem [resolvable:$true] %s618
          %624 = dma.vmem_to_hbm [thread:$0]  %s619, 4096, %s617, %s603, 128, 384, 8
        $region44: #{_linear_2d.1} parent=31 // pred_fallthru
          _
      $region32: #{_linear_2d.1} parent=5 // pred_fallthru
        _
      %p625 = scmp.le.s32.totalorder 2, %s16
      // Predicated region
      $region45: #{_linear_2d.1} parent=5 // pred_check
        %p626 = pneg %p625
      $region46: #{_linear_2d.1} parent=5 // pred_check_branch
        %628 = sbr.rel (%p626) target = $region48
      $region47: #{_linear_2d.1} parent=5 // pred_region
        %s629 = ssub.s32 %s16, 2
        // Predicated region
        $region49: #{_linear_2d.1} parent=47 // pred_check
          %p630 = pneg %p137
        $region50: #{_linear_2d.1} parent=47 // pred_check_branch
          %632 = sbr.rel (%p630) target = $region52
        $region51: #{_linear_2d.1} parent=47 // pred_region
          %s633 = sand.u32 %s122, 1
          %s634 = scalar_lea.sflag [#allocation4], %s633
          %s635 = sand.u32 %s122, 1
          %s636 = smul.addr %s635, 256
          %s637 = scalar_lea.vmem [#allocation7], %s636
          %638 = dma.done %s634, 4096
        $region52: #{_linear_2d.1} parent=47 // pred_fallthru
          _
      $region48: #{_linear_2d.1} parent=5 // pred_fallthru
        _
    $region6: #{_linear_2d.1} parent=1 // loop_footer
      %s20 = sadd.s32 1, %s16
    $region7: #{_linear_2d.1} parent=1 // loop_footer_branch
      %15 = sbr.rel target = $region3
    $region8: #{_linear_2d.1} parent=1 // loop_exit
      _
    %639 = vsyncpa [#allocation3], 1
    %s640 = scalar_lea.sflag [#allocation3], 1
    %641 = vsyncpa %s640, 1
    %642 = vsyncpa [#allocation6], 1
    %s643 = scalar_lea.sflag [#allocation6], 1
    %644 = vsyncpa %s643, 1
    %645 = vsyncpa [#allocation4], 1
    %s646 = scalar_lea.sflag [#allocation4], 1
    %647 = vsyncpa %s646, 1

</llo_original>
